<compile_context>
chip_gen: v5e
topology: v5e:2x2
jax: 0.10.0
libtpu: 0.0.40
codegen_flags: <defaults>
</compile_context>

<pallas_src>
import jax
import jax.numpy as jnp
from jax.experimental import pallas as pl
from jax.experimental.pallas import tpu as pltpu

# "config.LANE_LENGTH" from the original repo -- small deterministic value.
LANE_LENGTH = 16
OUTPUT_SIZE = 1
BATCH = 2

_LANES = 128                      # TPU vreg lane width
_VMEM_LIMIT = 32 * 1024 * 1024    # explicit; v7x scoped default, safe on all gens


def _small_kernel(x_ref, w_ref, b_ref, o_ref):
    # x_ref: (B, L) f32  -- whole array, single block
    # w_ref: (1, L) f32  -- weight row, sublane-broadcast
    # b_ref: (1,)   f32  -- bias, SMEM
    # o_ref: (B, 1) f32
    prod = x_ref[...] * w_ref[...]                           # VPU multiply
    o_ref[...] = jnp.sum(prod, axis=1, keepdims=True) + b_ref[0]


def _tiled_kernel(x_ref, w_ref, b_ref, o_ref):
    # x_ref: (TR, 128)   f32 -- each sublane row packs GROUP = 128 // L samples
    # w_ref: (128, GROUP) f32 -- block-diagonal expansion of the weight vector
    # b_ref: (1,)        f32 -- bias, SMEM
    # o_ref: (TR, GROUP) f32 -- GROUP batch outputs per sublane row
    acc = jnp.dot(x_ref[...], w_ref[...], preferred_element_type=jnp.float32)
    o_ref[...] = (acc + b_ref[0]).astype(o_ref.dtype)


def _forward_small(x, weight, bias):
    """Single-block path: no padding, no transpose, degenerate grid."""
    B, L = x.shape
    return pl.pallas_call(
        _small_kernel,
        out_shape=jax.ShapeDtypeStruct((B, 1), x.dtype),
        grid=(1,),
        in_specs=[
            pl.BlockSpec((B, L), lambda i: (0, 0)),             # whole x, one block
            pl.BlockSpec((1, L), lambda i: (0, 0)),             # weight row
            pl.BlockSpec(memory_space=pltpu.MemorySpace.SMEM),  # bias scalar
        ],
        out_specs=pl.BlockSpec((B, 1), lambda i: (0, 0)),
        compiler_params=pltpu.CompilerParams(
            dimension_semantics=("arbitrary",),
            vmem_limit_bytes=_VMEM_LIMIT,
        ),
    )(x, weight, bias)


def _forward_tiled(x, weight, bias, tile_rows):
    """Large-batch path: lane-dense reshape + block-diagonal matmul."""
    B, L = x.shape
    group = _LANES // L            # batch samples packed per 128-lane row (= 8)

    # Pad batch to a multiple of `group` so (B, L) -> (B/group, 128) is a free
    # row-major view.  Feed B as a multiple of `group` upstream to avoid this
    # (at most group-1 rows) pad copy entirely for huge batches.
    rows = pl.cdiv(B, group)
    b_pad = rows * group
    if b_pad != B:
        x = jnp.pad(x, ((0, b_pad - B), (0, 0)))
    x2 = x.reshape(rows, _LANES)   # no data movement

    # Block-diagonal weight: w_block[g*L + j, h] = weight[0, j] * (g == h),
    # so x2 @ w_block compacts the per-sample dot products into (rows, group).
    w_vec = weight.reshape(L).astype(x.dtype)
    w_block = (jnp.eye(group, dtype=x.dtype)[:, None, :]
               * w_vec[None, :, None]).reshape(group * L, group)

    tile_r = min(tile_rows, rows)             # full extent if batch is small
    n_tiles = pl.cdiv(rows, tile_r)           # ragged last tile is masked by Pallas

    out2 = pl.pallas_call(
        _tiled_kernel,
        out_shape=jax.ShapeDtypeStruct((rows, group), x.dtype),
        grid=(n_tiles,),
        in_specs=[
            pl.BlockSpec((tile_r, _LANES), lambda i: (i, 0)),    # lane-dense x tile
            pl.BlockSpec((group * L, group), lambda i: (0, 0)),  # resident weight
            pl.BlockSpec(memory_space=pltpu.MemorySpace.SMEM),   # bias scalar
        ],
        out_specs=pl.BlockSpec((tile_r, group), lambda i: (i, 0)),
        compiler_params=pltpu.CompilerParams(
            dimension_semantics=("parallel",),   # shards batch tiles over v7x's 2 TCs
            vmem_limit_bytes=_VMEM_LIMIT,
        ),
    )(x2, w_block, bias)

    # Free reshape back to the PyTorch (B, 1) convention; strip batch padding.
    return out2.reshape(b_pad, 1)[:B]


def zombienet_forward(x, weight, bias, *, tile_rows=4096, small_batch_max=256):
    """ZombieNet forward: fc1(x) = x @ weight.T + bias.

    x:      (B, L) float32
    weight: (1, L) float32   (PyTorch nn.Linear convention, output_size=1)
    bias:   (1,)   float32
    returns (B, 1) float32
    """
    B, L = x.shape
    O, L2 = weight.shape
    assert L == L2 and O == 1, "kernel is specialized to output_size=1"
    if B <= small_batch_max or (_LANES % L) != 0:
        return _forward_small(x, weight, bias)
    return _forward_tiled(x, weight, bias, tile_rows)


if __name__ == "__main__":
    key = jax.random.PRNGKey(0)
    kx, kw, kb, kx2 = jax.random.split(key, 4)

    # Deterministic "PyTorch-like" init: U(-1/sqrt(fan_in), 1/sqrt(fan_in)).
    bound = 1.0 / (LANE_LENGTH ** 0.5)
    weight = jax.random.uniform(kw, (OUTPUT_SIZE, LANE_LENGTH), jnp.float32,
                                minval=-bound, maxval=bound)
    bias = jax.random.uniform(kb, (OUTPUT_SIZE,), jnp.float32,
                              minval=-bound, maxval=bound)

    # Shipped shape (batch=2): single-block path -- no padding, transpose or grid.
    x = jax.random.normal(kx, (BATCH, LANE_LENGTH), jnp.float32)
    out = jax.block_until_ready(zombienet_forward(x, weight, bias))
    ref = x @ weight.T + bias[None, :]
    assert out.shape == (BATCH, OUTPUT_SIZE)
    assert jnp.allclose(out, ref, atol=1e-5, rtol=1e-5)

    # Also exercise the tiled large-batch path once (still a tiny problem).
    B_BIG = 1001
    x_big = jax.random.normal(kx2, (B_BIG, LANE_LENGTH), jnp.float32)
    out_big = jax.block_until_ready(zombienet_forward(x_big, weight, bias))
    ref_big = x_big @ weight.T + bias[None, :]
    assert out_big.shape == (B_BIG, OUTPUT_SIZE)
    assert jnp.allclose(out_big, ref_big, atol=1e-4, rtol=1e-4)

    print("KERNEL_OK")
</pallas_src>

<mosaic_0001>
module attributes {stable_mosaic.version = 11 : i64} {
  func.func @_small_kernel(%arg0: i32, %arg1: memref<2x16xf32, #tpu.memory_space<vmem>>, %arg2: memref<1x16xf32, #tpu.memory_space<vmem>>, %arg3: memref<1xf32, #tpu.memory_space<smem>>, %arg4: memref<2x1xf32, #tpu.memory_space<vmem>>) attributes {dimension_semantics = [#tpu.dimension_semantics<arbitrary>], iteration_bounds = array<i64: 1>, scalar_prefetch = 0 : i64, scratch_operands = 0 : i64, tpu.core_type = #tpu.core_type<tc>, window_params = [{pipeline_mode = #tpu.pipeline_mode<synchronous>, transform_indices = @transform_0, window_bounds = array<i64: 2, 16>}, {pipeline_mode = #tpu.pipeline_mode<synchronous>, transform_indices = @transform_1, window_bounds = array<i64: 1, 16>}, {transform_indices = @transform_2, window_bounds = array<i64: 1>}, {pipeline_mode = #tpu.pipeline_mode<synchronous>, transform_indices = @transform_3, window_bounds = array<i64: 2, 1>}]} {
    %c0 = arith.constant 0 : index
    %c0_0 = arith.constant 0 : index
    %0 = vector.load %arg1[%c0, %c0_0] : memref<2x16xf32, #tpu.memory_space<vmem>>, vector<2x16xf32>
    %c0_1 = arith.constant 0 : index
    %c0_2 = arith.constant 0 : index
    %1 = vector.load %arg2[%c0_1, %c0_2] : memref<1x16xf32, #tpu.memory_space<vmem>>, vector<1x16xf32>
    %2 = vector.broadcast %1 : vector<1x16xf32> to vector<2x16xf32>
    %3 = arith.mulf %0, %2 : vector<2x16xf32>
    %cst = arith.constant dense<0.000000e+00> : vector<2xf32>
    %4 = vector.multi_reduction <add>, %3, %cst [1] : vector<2x16xf32> to vector<2xf32>
    %5 = vector.shape_cast %4 : vector<2xf32> to vector<2x1xf32>
    %c0_3 = arith.constant 0 : index
    %6 = memref.load %arg3[%c0_3] : memref<1xf32, #tpu.memory_space<smem>>
    %7 = vector.broadcast %6 : f32 to vector<2x1xf32>
    %8 = arith.addf %5, %7 : vector<2x1xf32>
    %c0_4 = arith.constant 0 : index
    %c0_5 = arith.constant 0 : index
    %9 = vector.load %arg4[%c0_4, %c0_5] : memref<2x1xf32, #tpu.memory_space<vmem>>, vector<2x1xf32>
    tpu.vector_store %arg4[%c0_4, %c0_5], %8 {strides = array<i32>} : memref<2x1xf32, #tpu.memory_space<vmem>>, vector<2x1xf32>,
    return
  }
  func.func @transform_0(%arg0: i32) -> (i32, i32) {
    %c0_i32 = arith.constant 0 : i32
    %c0_i32_0 = arith.constant 0 : i32
    %c0_i32_1 = arith.constant 0 : i32
    return %c0_i32, %c0_i32_0 : i32, i32
  }
  func.func @transform_1(%arg0: i32) -> (i32, i32) {
    %c0_i32 = arith.constant 0 : i32
    %c0_i32_0 = arith.constant 0 : i32
    %c0_i32_1 = arith.constant 0 : i32
    return %c0_i32, %c0_i32_0 : i32, i32
  }
  func.func @transform_2(%arg0: i32) -> i32 {
    %c0_i32 = arith.constant 0 : i32
    %c0_i32_0 = arith.constant 0 : i32
    return %c0_i32 : i32
  }
  func.func @transform_3(%arg0: i32) -> (i32, i32) {
    %c0_i32 = arith.constant 0 : i32
    %c0_i32_0 = arith.constant 0 : i32
    %c0_i32_1 = arith.constant 0 : i32
    return %c0_i32, %c0_i32_0 : i32, i32
  }
}

</mosaic_0001>

<llo_original>
// kernel: tpu_custom_call.1
$region0: #{tpu_custom_call.1}
  #allocation0 [shape = 'u32[]', space=smem, size = 0x4, offset = 0x4, fixed_abs, tag = 'smem constant byte address 0x4 - core index']
  #allocation1 [shape = 'u32[72,128]{1,0:T(1,128)}', space=vmem, size = 0x9000, scoped, tag = 'internal scratch']
  #allocation2 [shape = 'f32[1]{0:T(128)S(6)}', space=smem, size = 0x200, scoped, tag = 'scoped memory for tpu_custom_call.1']
  %s0 = inlined_call_operand.vmem [shape: f32[2,16], index: 0, kind: input, shape index: {}]
  %s1 = inlined_call_operand.hbm [shape: f32[1,16], index: 1, kind: input, shape index: {}]
  %s2 = inlined_call_operand.<no memory space> [shape: f32[1], index: 2, kind: input, shape index: {}]
  %s3 = inlined_call_operand.vmem [shape: f32[2,1], index: 3, kind: output, shape index: {}]
  %s4 = sld [smem:[#allocation0]]
  $region26: #{tpu_custom_call.1} parent=0
    _
  %s6 = ssub.s32 1, %s4
  %s7 = scalar_select 0, %s6, %s4
  %8 = sst [smem:[#allocation2]] %s2
  $region1: #{tpu_custom_call.1} parent=0
    #allocation3 [shape = 'u8[512]{0}', space=vmem, size = 0x400, scoped, tag = 'input window, operand 1, single buffered']
    #allocation4 [shape = 's32[1]{0}', space=sflag, size = 0x4, scoped, tag = 'scoped memory for tpu_custom_call.1']
    %9 = vsyncpa [#allocation4], 0
    // Predicated region
    $region2: #{tpu_custom_call.1} parent=1 // pred_check
      _
    $region3: #{tpu_custom_call.1} parent=1 // pred_check_branch
      %11 = sbr.rel (0) target = $region5
    $region4: #{tpu_custom_call.1} parent=1 // pred_region
      _
    $region5: #{tpu_custom_call.1} parent=1 // pred_fallthru
      _
    // Predicated region
    $region6: #{tpu_custom_call.1} parent=1 // pred_check
      _
    $region7: #{tpu_custom_call.1} parent=1 // pred_check_branch
      %13 = sbr.rel (0) target = $region9
    $region8: #{tpu_custom_call.1} parent=1 // pred_region
      %15 = vsyncadd [#allocation4], 0
      %s17 = sshll.u32 %s1, 4
      %s18 = int_to_ptr.hbm [resolvable:$true] %s17
      %s19 = sshll.u32 [#allocation3], 4
      %s20 = int_to_ptr.vmem [resolvable:$true] %s19
      %22 = dma.hbm_to_vmem [thread:$0]  %s18, 16, %s20, [#allocation4]
    $region9: #{tpu_custom_call.1} parent=1 // pred_fallthru
      _
    // Predicated region
    $region10: #{tpu_custom_call.1} parent=1 // pred_check
      _
    $region11: #{tpu_custom_call.1} parent=1 // pred_check_branch
      %24 = sbr.rel (0) target = $region13
    $region12: #{tpu_custom_call.1} parent=1 // pred_region
      _
    $region13: #{tpu_custom_call.1} parent=1 // pred_fallthru
      _
    // Predicated region
    $region14: #{tpu_custom_call.1} parent=1 // pred_check
      _
    $region15: #{tpu_custom_call.1} parent=1 // pred_check_branch
      %26 = sbr.rel (0) target = $region17
    $region16: #{tpu_custom_call.1} parent=1 // pred_region
      %28 = dma.done [#allocation4], 16
    $region17: #{tpu_custom_call.1} parent=1 // pred_fallthru
      _
    %v29 = vld [vmem:[%s0] sm:$0x3]
    %v30 = vld [vmem:[#allocation3] sm:$0x1]
    %v32 = vperm.slane %v30, 0
    %v34 = vmul.f32 %v29, %v32
    %vm35 = vcmask 123904
    %v36 = vsel %vm35, %v34, 0.0
    %37 = vadd.xlane.f32.xlu0 %v36
    %v38 = vpop.xlane.xlu0 %37
    %s39 = sld [smem:[#allocation2]]
    %v40 = vstv %s39
    %v41 = vadd.f32 %v38, %v40
    %vm42 = vcmask 1024
    %43 = vst.msk [vmem:[%s3] sm:$0x3] %vm42, %v41
    // Predicated region
    $region18: #{tpu_custom_call.1} parent=1 // pred_check
      _
    $region19: #{tpu_custom_call.1} parent=1 // pred_check_branch
      %45 = sbr.rel (0) target = $region21
    $region20: #{tpu_custom_call.1} parent=1 // pred_region
      _
    $region21: #{tpu_custom_call.1} parent=1 // pred_fallthru
      _
    // Predicated region
    $region22: #{tpu_custom_call.1} parent=1 // pred_check
      _
    $region23: #{tpu_custom_call.1} parent=1 // pred_check_branch
      %47 = sbr.rel (0) target = $region25
    $region24: #{tpu_custom_call.1} parent=1 // pred_region
      _
    $region25: #{tpu_custom_call.1} parent=1 // pred_fallthru
      _
    %48 = vsyncpa [#allocation4], 1

</llo_original>
